<compile_context>
chip_gen: v6e
topology: v6e:2x2x1
jax: 0.10.0
libtpu: 0.0.40
codegen_flags: <defaults>
</compile_context>

<pallas_src>
import functools

import jax
import jax.numpy as jnp
from jax.experimental import pallas as pl
from jax.experimental.pallas import tpu as pltpu


def _bilinear_kernel(zw_ref, zt_ref, o_ref):
    # zw_ref: (TM, D)  = (z @ W) row tile (precomputed in the wrapper)
    # zt_ref: (D, N)   = full z.T, VMEM-resident across the whole grid
    # o_ref : (TM, TN) = output adjacency tile
    j = pl.program_id(1)
    tn = o_ref.shape[1]
    zt_blk = zt_ref[:, pl.ds(pl.multiple_of(j * tn, 128), tn)]
    scores = jnp.dot(zw_ref[...], zt_blk, preferred_element_type=jnp.float32)
    # sigmoid(x) = 0.5 * tanh(0.5 * x) + 0.5 : one EUP push, exact math,
    # leaves the store path (the real bottleneck) and the VPU mostly free.
    o_ref[...] = (0.5 * jnp.tanh(0.5 * scores) + 0.5).astype(o_ref.dtype)


def _pick_tile(n, requested, granularity):
    """Largest t <= requested with n % t == 0 and (t == n or t % granularity == 0)."""
    t = min(requested, n)
    if n % t == 0 and (t == n or t % granularity == 0):
        return t
    d = (t // granularity) * granularity
    while d >= granularity:
        if n % d == 0:
            return d
        d -= granularity
    return n  # full extent is always legal


def _vmem_cap_bytes():
    """Per-generation scoped-VMEM ceiling (48 MiB-ish on v7x, 60 MiB on 128 MiB chips)."""
    try:
        phys = int(pltpu.get_tpu_info().vmem_capacity_bytes)
    except Exception:  # non-TPU tracing / older runtimes
        phys = 128 << 20
    return min(60 << 20, int(phys * 3 // 4))


@functools.partial(
    jax.jit, static_argnames=("tm", "tn", "operand_dtype", "out_dtype")
)
def bilinear_decoder(z, w, *, tm=1024, tn=1024,
                     operand_dtype=jnp.float32, out_dtype=jnp.float32):
    """adj_recon = sigmoid((z @ w) @ z.T), tiled Pallas kernel.

    operand_dtype: dtype of the MXU operands (float32 or bfloat16). Accumulation
                   and the sigmoid are always float32.
    out_dtype    : dtype of the stored adjacency (float32 or bfloat16). bf16
                   halves the dominant N^2 writeback traffic (opt-in).
    """
    n, d = z.shape
    assert w.shape == (d, d)

    # ---- Prologue (hoisted out of the kernel, runs once in plain XLA) ----
    zw = jnp.dot(z, w, preferred_element_type=jnp.float32)  # (N, D)
    zt = z.T                                                # (D, N), lane-dense cols
    zw = zw.astype(operand_dtype)
    zt = zt.astype(operand_dtype)

    # ---- Tile selection (divisors of N; split ROWS if the grid collapses) ----
    tm = _pick_tile(n, tm, 8)
    tn = _pick_tile(n, tn, 128)
    if (n // tm) * (n // tn) == 1 and n >= 16:
        tm = _pick_tile(n, n // 2, 8)   # give a megacore / v7x dual-TC chip work
    grid = (n // tm, n // tn)

    # ---- Scoped-VMEM budget: double-buffered tiles + resident zT + headroom ----
    op_bytes = jnp.dtype(operand_dtype).itemsize
    out_bytes = jnp.dtype(out_dtype).itemsize
    tile_bytes = (2 * (op_bytes * tm * d + out_bytes * tm * tn)  # zw + out (dbl-buf)
                  + 2 * op_bytes * d * n)                        # resident zT
    cap = _vmem_cap_bytes()
    vmem_limit = int(min(max(tile_bytes + (4 << 20), 32 << 20), cap))

    cost = pl.CostEstimate(
        flops=2 * n * n * d,
        transcendentals=n * n,
        bytes_accessed=n * n * out_bytes + 2 * n * d * op_bytes,
    )

    return pl.pallas_call(
        _bilinear_kernel,
        out_shape=jax.ShapeDtypeStruct((n, n), out_dtype),
        grid_spec=pltpu.PrefetchScalarGridSpec(
            num_scalar_prefetch=0,
            grid=grid,
            in_specs=[
                # (z @ W) row block for this output row-tile
                pl.BlockSpec((tm, d), lambda i, j: (i, 0)),
                # full z.T, resident in VMEM (same block for every grid step)
                pl.BlockSpec((d, n), lambda i, j: (0, 0)),
            ],
            out_specs=pl.BlockSpec((tm, tn), lambda i, j: (i, j)),
        ),
        compiler_params=pltpu.CompilerParams(
            dimension_semantics=("parallel", "parallel"),
            vmem_limit_bytes=vmem_limit,
        ),
        cost_estimate=cost,
    )(zw, zt)


def xavier_uniform(key, shape, dtype=jnp.float32):
    fan_in, fan_out = shape
    limit = (6.0 / (fan_in + fan_out)) ** 0.5
    return jax.random.uniform(key, shape, dtype=dtype, minval=-limit, maxval=limit)


if __name__ == "__main__":
    num_nodes = 256
    latent_dim = 32

    key = jax.random.PRNGKey(0)
    k_z, k_w = jax.random.split(key)

    z = jax.random.normal(k_z, (num_nodes, latent_dim), dtype=jnp.float32)
    # Deterministic xavier-uniform init of the bilinear weight (latent_dim, latent_dim)
    w = xavier_uniform(k_w, (latent_dim, latent_dim))

    # Reference (plain JAX / exact sigmoid)
    ref = jax.nn.sigmoid((z @ w) @ z.T)

    # Default path: f32 operands, f32 output. tanh-based sigmoid is exact math,
    # so only matmul rounding remains.
    adj_recon = bilinear_decoder(z, w)
    jax.block_until_ready(adj_recon)
    assert adj_recon.shape == (num_nodes, num_nodes)
    assert adj_recon.dtype == jnp.float32
    assert float(jnp.max(jnp.abs(adj_recon - ref))) < 1e-3

    # bf16 MXU-operand path (halves input DMA; accumulation/sigmoid stay f32).
    adj_bf16_in = bilinear_decoder(z, w, operand_dtype=jnp.bfloat16)
    jax.block_until_ready(adj_bf16_in)
    assert float(jnp.max(jnp.abs(adj_bf16_in - ref))) < 5e-2

    # bf16 OUTPUT path: halves the dominant N^2 writeback (~2x on v5e/v6e).
    adj_bf16_out = bilinear_decoder(
        z, w, operand_dtype=jnp.bfloat16, out_dtype=jnp.bfloat16
    )
    jax.block_until_ready(adj_bf16_out)
    assert adj_bf16_out.dtype == jnp.bfloat16
    assert float(jnp.max(jnp.abs(adj_bf16_out.astype(jnp.float32) - ref))) < 5e-2

    print("KERNEL_OK")
</pallas_src>

<mosaic_0001>
module attributes {stable_mosaic.version = 11 : i64} {
  func.func @_bilinear_kernel(%arg0: i32, %arg1: i32, %arg2: memref<128x32xf32, #tpu.memory_space<vmem>>, %arg3: memref<32x256xf32, #tpu.memory_space<vmem>>, %arg4: memref<128x256xf32, #tpu.memory_space<vmem>>) attributes {dimension_semantics = [#tpu.dimension_semantics<parallel>, #tpu.dimension_semantics<parallel>], iteration_bounds = array<i64: 2, 1>, scalar_prefetch = 0 : i64, scratch_operands = 0 : i64, tpu.core_type = #tpu.core_type<tc>, window_params = [{transform_indices = @transform_0, window_bounds = array<i64: 128, 32>}, {pipeline_mode = #tpu.pipeline_mode<synchronous>, transform_indices = @transform_1, window_bounds = array<i64: 32, 256>}, {transform_indices = @transform_2, window_bounds = array<i64: 128, 256>}]} {
    %c256_i32 = arith.constant 256 : i32
    %0 = arith.muli %arg1, %c256_i32 : i32
    %1 = tpu.assume_multiple %0, 128 : i32
    %c0 = arith.constant 0 : index
    %2 = arith.index_cast %1 : i32 to index
    %3 = vector.load %arg3[%c0, %2] : memref<32x256xf32, #tpu.memory_space<vmem>>, vector<32x256xf32>
    %c0_0 = arith.constant 0 : index
    %c0_1 = arith.constant 0 : index
    %4 = vector.load %arg2[%c0_0, %c0_1] : memref<128x32xf32, #tpu.memory_space<vmem>>, vector<128x32xf32>
    %cst = arith.constant dense<0.000000e+00> : vector<128x256xf32>
    %5 = tpu.matmul %4, %3, %cst {dimension_numbers = #tpu.dot_dimension_numbers<[1], [0], [0], [1], [0, 0, 1, 1], [], []>} : vector<128x32xf32>, vector<32x256xf32>, vector<128x256xf32> -> vector<128x256xf32>
    %cst_2 = arith.constant 5.000000e-01 : f32
    %6 = vector.broadcast %cst_2 : f32 to vector<128x256xf32>
    %7 = arith.mulf %6, %5 : vector<128x256xf32>
    %8 = math.tanh %7 : vector<128x256xf32>
    %cst_3 = arith.constant 5.000000e-01 : f32
    %9 = vector.broadcast %cst_3 : f32 to vector<128x256xf32>
    %10 = arith.mulf %9, %8 : vector<128x256xf32>
    %cst_4 = arith.constant 5.000000e-01 : f32
    %11 = vector.broadcast %cst_4 : f32 to vector<128x256xf32>
    %12 = arith.addf %10, %11 : vector<128x256xf32>
    %c0_5 = arith.constant 0 : index
    %c0_6 = arith.constant 0 : index
    %13 = vector.load %arg4[%c0_5, %c0_6] : memref<128x256xf32, #tpu.memory_space<vmem>>, vector<128x256xf32>
    tpu.vector_store %arg4[%c0_5, %c0_6], %12 {strides = array<i32>} : memref<128x256xf32, #tpu.memory_space<vmem>>, vector<128x256xf32>,
    return
  }
  func.func @transform_0(%arg0: i32, %arg1: i32) -> (i32, i32) {
    %c0_i32 = arith.constant 0 : i32
    %c0_i32_0 = arith.constant 0 : i32
    return %arg0, %c0_i32 : i32, i32
  }
  func.func @transform_1(%arg0: i32, %arg1: i32) -> (i32, i32) {
    %c0_i32 = arith.constant 0 : i32
    %c0_i32_0 = arith.constant 0 : i32
    %c0_i32_1 = arith.constant 0 : i32
    return %c0_i32, %c0_i32_0 : i32, i32
  }
  func.func @transform_2(%arg0: i32, %arg1: i32) -> (i32, i32) {
    %c0_i32 = arith.constant 0 : i32
    return %arg0, %arg1 : i32, i32
  }
}

</mosaic_0001>

<llo_original>
// kernel: bilinear_decoder.1
$region0: #{bilinear_decoder.1}
  #allocation0 [shape = 'u32[]', space=smem, size = 0x4, offset = 0x4, fixed_abs, tag = 'smem constant byte address 0x4 - core index']
  #allocation1 [shape = 'u32[144,128]{1,0:T(1,128)}', space=vmem, size = 0x12000, scoped, tag = 'internal scratch']
  %s0 = inlined_call_operand.vmem [shape: f32[256,32], index: 0, kind: input, shape index: {}]
  %s1 = inlined_call_operand.vmem [shape: f32[32,256], index: 1, kind: input, shape index: {}]
  %s2 = inlined_call_operand.hbm [shape: f32[256,256], index: 2, kind: output, shape index: {}]
  %s3 = sld [smem:[#allocation0]]
  $region41: #{bilinear_decoder.1} parent=0
    _
  %s5 = ssub.s32 1, %s3
  %s6 = scalar_select 0, %s5, %s3
  $region1: #{bilinear_decoder.1} parent=0
    #allocation2 [shape = 'u8[262144]{0}', space=vmem, size = 0x40000, scoped, tag = 'output window, operand 0']
    #allocation3 [shape = 's32[2]{0}', space=sflag, size = 0x8, scoped, tag = 'scoped memory for bilinear_decoder.1']
    %7 = vsyncpa [#allocation3], 0
    %s8 = scalar_lea.sflag [#allocation3], 1
    %9 = vsyncpa %s8, 0
    loop: start=0, step=1, limit=4
    $region2: #{bilinear_decoder.1} parent=1 // loop_pre_header
      _
    $region3: #{bilinear_decoder.1} parent=1 // loop_header
      %s11 = sphi 0, %s15
      %p12 = scmp.ge.s32.totalorder %s11, 4
      %s18 = sphi 0, %s30
      %s19 = sphi 0, %s26
      %s20 = sphi 0, %s18
      %s21 = sphi 0, %s19
      %s22 = sphi 0, %s20
      %s23 = sphi 0, %s21
      %s33 = sphi 0, %s35
      %s36 = sphi 0, %s33
      %s37 = sphi 0, %s36
      %s53 = sphi 0, %s37
      %s57 = sphi 0, %s57
      %s59 = sphi 0, %s57
      %s60 = sphi 0, %s59
      %s74 = sphi 0, %s60
      %s82 = sphi 0, %s84
      %s85 = sphi 0, %s82
      %s86 = sphi 0, %s85
      %s102 = sphi 0, %s86
    $region4: #{bilinear_decoder.1} parent=1 // loop_header_branch
      %14 = sbr.rel (%p12) target = $region8
    $region5: #{bilinear_decoder.1} parent=1 // loop_body
      %s16 = ssub.s32 %s11, 1
      %s17 = ssub.s32 %s11, 2
      %s24 = sadd.s32 1, %s19
      %p25 = scmp.ge.s32.totalorder %s24, 1
      %s26 = scalar_select %p25, 0, %s24
      %s27 = sadd.s32 1, %s18
      %s28 = scalar_select %p25, %s27, %s18
      %p29 = scmp.ge.s32.totalorder %s28, 2
      %s30 = scalar_select %p29, 0, %s28
      %s31 = ssub.s32 %s18, %s30
      %p32 = scmp.eq.s32.totalorder %s31, 0
      %s34 = sadd.s32 %s33, 1
      %s35 = scalar_select %p32, %s33, %s34
      %p38 = pneg %p32
      %p39 = scmp.eq.s32.totalorder %s11, 1
      %p40 = por %p38, %p39
      %p41 = scmp.ne.s32.totalorder %s33, %s36
      %p42 = scmp.eq.s32.totalorder %s11, 0
      %p43 = por %p41, %p42
      %p44 = scmp.ne.s32.totalorder %s33, %s36
      %p45 = scmp.eq.s32.totalorder %s16, 1
      %p46 = por %p44, %p45
      %p47 = scmp.ne.s32.totalorder %s36, %s37
      %p48 = scmp.eq.s32.totalorder %s16, 0
      %p49 = por %p47, %p48
      %p50 = scmp.ne.s32.totalorder %s36, %s37
      %p51 = scmp.eq.s32.totalorder %s17, 1
      %p52 = por %p50, %p51
      %p54 = scmp.ne.s32.totalorder %s37, %s53
      %p55 = scmp.eq.s32.totalorder %s17, 0
      %p56 = por %p54, %p55
      %s58 = sadd.s32 %s57, 1
      %p61 = scmp.eq.s32.totalorder %s11, 1
      %p62 = scmp.ne.s32.totalorder %s57, %s59
      %p63 = scmp.eq.s32.totalorder %s11, 0
      %p64 = por %p62, %p63
      %p65 = scmp.ne.s32.totalorder %s57, %s59
      %p66 = scmp.eq.s32.totalorder %s16, 1
      %p67 = por %p65, %p66
      %p68 = scmp.ne.s32.totalorder %s59, %s60
      %p69 = scmp.eq.s32.totalorder %s16, 0
      %p70 = por %p68, %p69
      %p71 = scmp.ne.s32.totalorder %s59, %s60
      %p72 = scmp.eq.s32.totalorder %s17, 1
      %p73 = por %p71, %p72
      %p75 = scmp.ne.s32.totalorder %s60, %s74
      %p76 = scmp.eq.s32.totalorder %s17, 0
      %p77 = por %p75, %p76
      %s78 = ssub.s32 %s18, %s30
      %s79 = ssub.s32 %s19, %s26
      %s80 = sor.u32 %s78, %s79
      %p81 = scmp.eq.s32.totalorder %s80, 0
      %s83 = sadd.s32 %s82, 1
      %s84 = scalar_select %p81, %s82, %s83
      %p87 = pneg %p81
      %p88 = scmp.eq.s32.totalorder %s11, 1
      %p89 = por %p87, %p88
      %p90 = scmp.ne.s32.totalorder %s82, %s85
      %p91 = scmp.eq.s32.totalorder %s11, 0
      %p92 = por %p90, %p91
      %p93 = scmp.ne.s32.totalorder %s82, %s85
      %p94 = scmp.eq.s32.totalorder %s16, 1
      %p95 = por %p93, %p94
      %p96 = scmp.ne.s32.totalorder %s85, %s86
      %p97 = scmp.eq.s32.totalorder %s16, 0
      %p98 = por %p96, %p97
      %p99 = scmp.ne.s32.totalorder %s85, %s86
      %p100 = scmp.eq.s32.totalorder %s17, 1
      %p101 = por %p99, %p100
      %p103 = scmp.ne.s32.totalorder %s86, %s102
      %p104 = scmp.eq.s32.totalorder %s17, 0
      %p105 = por %p103, %p104
      %p106 = scmp.le.s32.totalorder 1, %s11
      %p107 = scmp.lt.s32.totalorder %s11, 3
      %p108 = pnand %p106, %p107
      %p109 = pneg %p108
      // Predicated region
      $region9: #{bilinear_decoder.1} parent=5 // pred_check
        _
      $region10: #{bilinear_decoder.1} parent=5 // pred_check_branch
        %111 = sbr.rel (%p108) target = $region12
      $region11: #{bilinear_decoder.1} parent=5 // pred_region
        %s112 = ssub.s32 %s11, 1
        // Predicated region
        $region13: #{bilinear_decoder.1} parent=11 // pred_check
          %p113 = pneg %p70
        $region14: #{bilinear_decoder.1} parent=11 // pred_check_branch
          %115 = sbr.rel (%p113) target = $region16
        $region15: #{bilinear_decoder.1} parent=11 // pred_region
          _
        $region16: #{bilinear_decoder.1} parent=11 // pred_fallthru
          _
      $region12: #{bilinear_decoder.1} parent=5 // pred_fallthru
        _
      %p116 = scmp.lt.s32.totalorder %s11, 2
      // Predicated region
      $region17: #{bilinear_decoder.1} parent=5 // pred_check
        %p117 = pneg %p116
      $region18: #{bilinear_decoder.1} parent=5 // pred_check_branch
        %119 = sbr.rel (%p117) target = $region20
      $region19: #{bilinear_decoder.1} parent=5 // pred_region
        // Predicated region
        $region21: #{bilinear_decoder.1} parent=19 // pred_check
          %p120 = pneg %p43
        $region22: #{bilinear_decoder.1} parent=19 // pred_check_branch
          %122 = sbr.rel (%p120) target = $region24
        $region23: #{bilinear_decoder.1} parent=19 // pred_region
          %s123 = smul.u32 16, %s18
          %p124 = scmp.lt.s32.totalorder %s123, 31
          %s125 = scalar_select %p124, %s123, 31
          %s126 = smul.addr %s125, 8
          %s127 = scalar_lea.vmem %s0, %s126
          %s128 = smul.u32 16, %s18
        $region24: #{bilinear_decoder.1} parent=19 // pred_fallthru
          _
      $region20: #{bilinear_decoder.1} parent=5 // pred_fallthru
        _
      %p129 = scmp.le.s32.totalorder 1, %s11
      %p130 = scmp.lt.s32.totalorder %s11, 3
      %p131 = pnand %p129, %p130
      %p132 = pneg %p131
      // Predicated region
      $region25: #{bilinear_decoder.1} parent=5 // pred_check
        _
      $region26: #{bilinear_decoder.1} parent=5 // pred_check_branch
        %134 = sbr.rel (%p131) target = $region28
      $region27: #{bilinear_decoder.1} parent=5 // pred_region
        %s135 = ssub.s32 %s11, 1
        %s136 = smul.u32 16, %s20
        %p137 = scmp.lt.s32.totalorder %s136, 31
        %s138 = scalar_select %p137, %s136, 31
        %s139 = smul.addr %s138, 8
        %s140 = scalar_lea.vmem %s0, %s139
        %p141 = pneg %p49
        %p142 = pneg %p46
        %p143 = pneg %p70
        %p144 = pneg %p67
        %p145 = pneg %p98
        %p146 = pneg %p95
        %s147 = sand.u32 %s85, 1
        %s148 = scalar_lea.sflag [#allocation3], %s147
        %s149 = sand.u32 %s85, 1
        %s150 = smul.addr %s149, 256
        %s151 = scalar_lea.vmem [#allocation2], %s150
        %s152 = smul.u32 16, %s20
        %p153 = scmp.lt.s32.totalorder %s152, 31
        %s154 = scalar_select %p153, %s152, 31
        %s155 = smul.addr %s154, 8
        %s156 = scalar_lea.vmem %s0, %s155
        %s157 = smul.u32 16, %s20
        %s158 = smul.u32 16, %s20
        %s159 = smul.u32 2, %s21
        %s160 = smul.u32 %s21, 256
        %s161 = sshra.s32 %s160, 7
        %s162 = sand.u32 %s160, 127
        %s163 = smul.addr %s161, 8
        %s164 = scalar_lea.vmem %s1, %s163
        %v165 = vld [vmem:[%s164] sm:$0xff]
        %v166 = vld [vmem:[%s164 + $0x8] sm:$0xff]
        %v167 = vld [vmem:[%s164 + $0x10] sm:$0xff]
        %v168 = vld [vmem:[%s164 + $0x18] sm:$0xff]
        %v169 = vld [vmem:[%s164 + $0x20] sm:$0xff]
        %v170 = vld [vmem:[%s164 + $0x28] sm:$0xff]
        %v171 = vld [vmem:[%s164 + $0x30] sm:$0xff]
        %v172 = vld [vmem:[%s164 + $0x38] sm:$0xff]
        %v173 = vld [vmem:[%s156] sm:$0xff]
        %v174 = vld [vmem:[%s156 + $0x8] sm:$0xff]
        %v175 = vld [vmem:[%s156 + $0x10] sm:$0xff]
        %v176 = vld [vmem:[%s156 + $0x18] sm:$0xff]
        %v177 = vld [vmem:[%s156 + $0x20] sm:$0xff]
        %v178 = vld [vmem:[%s156 + $0x28] sm:$0xff]
        %v179 = vld [vmem:[%s156 + $0x30] sm:$0xff]
        %v180 = vld [vmem:[%s156 + $0x38] sm:$0xff]
        %v181 = vld [vmem:[%s156 + $0x40] sm:$0xff]
        %v182 = vld [vmem:[%s156 + $0x48] sm:$0xff]
        %v183 = vld [vmem:[%s156 + $0x50] sm:$0xff]
        %v184 = vld [vmem:[%s156 + $0x58] sm:$0xff]
        %v185 = vld [vmem:[%s156 + $0x60] sm:$0xff]
        %v186 = vld [vmem:[%s156 + $0x68] sm:$0xff]
        %v187 = vld [vmem:[%s156 + $0x70] sm:$0xff]
        %v188 = vld [vmem:[%s156 + $0x78] sm:$0xff]
        %vm189 = vcmask 261120
        %v191 = vsel %vm189, %v173, 0
        %v194 = vsel %vm189, %v174, 0
        %v197 = vsel %vm189, %v175, 0
        %v200 = vsel %vm189, %v176, 0
        %v203 = vsel %vm189, %v177, 0
        %v206 = vsel %vm189, %v178, 0
        %v209 = vsel %vm189, %v179, 0
        %v212 = vsel %vm189, %v180, 0
        %v215 = vsel %vm189, %v181, 0
        %v218 = vsel %vm189, %v182, 0
        %v221 = vsel %vm189, %v183, 0
        %v224 = vsel %vm189, %v184, 0
        %v227 = vsel %vm189, %v185, 0
        %v230 = vsel %vm189, %v186, 0
        %v233 = vsel %vm189, %v187, 0
        %v236 = vsel %vm189, %v188, 0
        %238 = vmatprep.subr.mxu0 0.0
        %239 = vmatpush1.msra.mxu0 0.0
        %240 = vmatprep.subr.mxu0 0.0
        %241 = vmatpush1.msra.mxu0 0.0
        %242 = vmatprep.subr.mxu0 0.0
        %243 = vmatpush1.msra.mxu0 0.0
        %244 = vmatprep.subr.mxu0 0.0
        %245 = vmatpush1.msra.mxu0 0.0
        %246 = vmatprep.subr.mxu0 0.0
        %247 = vmatpush1.msra.mxu0 0.0
        %248 = vmatprep.subr.mxu0 0.0
        %249 = vmatpush1.msra.mxu0 0.0
        %250 = vmatprep.subr.mxu0 0.0
        %251 = vmatpush1.msra.mxu0 0.0
        %252 = vmatprep.subr.mxu0 0.0
        %253 = vmatpush1.msra.mxu0 0.0
        %254 = vmatprep.subr.mxu0 0.0
        %255 = vmatpush1.msra.mxu0 0.0
        %256 = vmatprep.subr.mxu0 0.0
        %257 = vmatpush1.msra.mxu0 0.0
        %258 = vmatprep.subr.mxu0 0.0
        %259 = vmatpush1.msra.mxu0 0.0
        %260 = vmatprep.subr.mxu0 0.0
        %261 = vmatpush1.msra.mxu0 0.0
        %262 = vmatprep.subr.mxu0 %v172
        %263 = vmatpush1.msra.mxu0 %v171
        %264 = vmatprep.subr.mxu0 %v170
        %265 = vmatpush1.msra.mxu0 %v169
        %266 = vmatprep.subr.mxu0 %v168
        %267 = vmatpush1.msra.mxu0 %v167
        %268 = vmatprep.subr.mxu0 %v166
        %269 = vmatpush1.msra.mxu0 %v165
        %270 = vmatprep.subr.mxu0 0.0
        %271 = vmatpush2.msra.mxu0 0.0
        %272 = vmatprep.subr.mxu0 0.0
        %273 = vmatpush2.msra.mxu0 0.0
        %274 = vmatprep.subr.mxu0 0.0
        %275 = vmatpush2.msra.mxu0 0.0
        %276 = vmatprep.subr.mxu0 0.0
        %277 = vmatpush2.msra.mxu0 0.0
        %278 = vmatprep.subr.mxu0 0.0
        %279 = vmatpush2.msra.mxu0 0.0
        %280 = vmatprep.subr.mxu0 0.0
        %281 = vmatpush2.msra.mxu0 0.0
        %282 = vmatprep.subr.mxu0 0.0
        %283 = vmatpush2.msra.mxu0 0.0
        %284 = vmatprep.subr.mxu0 0.0
        %285 = vmatpush2.msra.mxu0 0.0
        %286 = vmatprep.subr.mxu0 0.0
        %287 = vmatpush2.msra.mxu0 0.0
        %288 = vmatprep.subr.mxu0 0.0
        %289 = vmatpush2.msra.mxu0 0.0
        %290 = vmatprep.subr.mxu0 0.0
        %291 = vmatpush2.msra.mxu0 0.0
        %292 = vmatprep.subr.mxu0 0.0
        %293 = vmatpush2.msra.mxu0 0.0
        %294 = vmatprep.subr.mxu0 0.0
        %295 = vmatpush2.msra.mxu0 0.0
        %296 = vmatprep.subr.mxu0 0.0
        %297 = vmatpush2.msra.mxu0 0.0
        %298 = vmatprep.subr.mxu0 0.0
        %299 = vmatpush2.msra.mxu0 0.0
        %300 = vmatprep.subr.mxu0 0.0
        %301 = vmatpush2.msra.mxu0 0.0
        %302 = vmatprep.mubr.f32.mxu0 0.0
        %303 = vmatmul.mubr.f32.gmra.mxu0 %v191
        %v304 = vpop.f32.mrf.mxu0
        %v305 = vadd.f32 0.0, %v304
        %v306 = vpop.f32.mrf.mxu0
        %v307 = vadd.f32 0.0, %v306
        %308 = vmatprep.mubr.f32.mxu0 0.0
        %309 = vmatmul.mubr.f32.gmra.mxu0 %v194
        %v310 = vpop.f32.mrf.mxu0
        %v311 = vadd.f32 0.0, %v310
        %v312 = vpop.f32.mrf.mxu0
        %v313 = vadd.f32 0.0, %v312
        %314 = vmatprep.mubr.f32.mxu0 0.0
        %315 = vmatmul.mubr.f32.gmra.mxu0 %v197
        %v316 = vpop.f32.mrf.mxu0
        %v317 = vadd.f32 0.0, %v316
        %v318 = vpop.f32.mrf.mxu0
        %v319 = vadd.f32 0.0, %v318
        %320 = vmatprep.mubr.f32.mxu0 0.0
        %321 = vmatmul.mubr.f32.gmra.mxu0 %v200
        %v322 = vpop.f32.mrf.mxu0
        %v323 = vadd.f32 0.0, %v322
        %v324 = vpop.f32.mrf.mxu0
        %v325 = vadd.f32 0.0, %v324
        %326 = vmatprep.mubr.f32.mxu0 0.0
        %327 = vmatmul.mubr.f32.gmra.mxu0 %v203
        %v328 = vpop.f32.mrf.mxu0
        %v329 = vadd.f32 0.0, %v328
        %v330 = vpop.f32.mrf.mxu0
        %v331 = vadd.f32 0.0, %v330
        %332 = vmatprep.mubr.f32.mxu0 0.0
        %333 = vmatmul.mubr.f32.gmra.mxu0 %v206
        %v334 = vpop.f32.mrf.mxu0
        %v335 = vadd.f32 0.0, %v334
        %v336 = vpop.f32.mrf.mxu0
        %v337 = vadd.f32 0.0, %v336
        %338 = vmatprep.mubr.f32.mxu0 0.0
        %339 = vmatmul.mubr.f32.gmra.mxu0 %v209
        %v340 = vpop.f32.mrf.mxu0
        %v341 = vadd.f32 0.0, %v340
        %v342 = vpop.f32.mrf.mxu0
        %v343 = vadd.f32 0.0, %v342
        %344 = vmatprep.mubr.f32.mxu0 0.0
        %345 = vmatmul.mubr.f32.gmra.mxu0 %v212
        %v346 = vpop.f32.mrf.mxu0
        %v347 = vadd.f32 0.0, %v346
        %v348 = vpop.f32.mrf.mxu0
        %v349 = vadd.f32 0.0, %v348
        %350 = vmatprep.mubr.f32.mxu0 0.0
        %351 = vmatmul.mubr.f32.gmra.mxu0 %v215
        %v352 = vpop.f32.mrf.mxu0
        %v353 = vadd.f32 0.0, %v352
        %v354 = vpop.f32.mrf.mxu0
        %v355 = vadd.f32 0.0, %v354
        %356 = vmatprep.mubr.f32.mxu0 0.0
        %357 = vmatmul.mubr.f32.gmra.mxu0 %v218
        %v358 = vpop.f32.mrf.mxu0
        %v359 = vadd.f32 0.0, %v358
        %v360 = vpop.f32.mrf.mxu0
        %v361 = vadd.f32 0.0, %v360
        %362 = vmatprep.mubr.f32.mxu0 0.0
        %363 = vmatmul.mubr.f32.gmra.mxu0 %v221
        %v364 = vpop.f32.mrf.mxu0
        %v365 = vadd.f32 0.0, %v364
        %v366 = vpop.f32.mrf.mxu0
        %v367 = vadd.f32 0.0, %v366
        %368 = vmatprep.mubr.f32.mxu0 0.0
        %369 = vmatmul.mubr.f32.gmra.mxu0 %v224
        %v370 = vpop.f32.mrf.mxu0
        %v371 = vadd.f32 0.0, %v370
        %v372 = vpop.f32.mrf.mxu0
        %v373 = vadd.f32 0.0, %v372
        %374 = vmatprep.mubr.f32.mxu0 0.0
        %375 = vmatmul.mubr.f32.gmra.mxu0 %v227
        %v376 = vpop.f32.mrf.mxu0
        %v377 = vadd.f32 0.0, %v376
        %v378 = vpop.f32.mrf.mxu0
        %v379 = vadd.f32 0.0, %v378
        %380 = vmatprep.mubr.f32.mxu0 0.0
        %381 = vmatmul.mubr.f32.gmra.mxu0 %v230
        %v382 = vpop.f32.mrf.mxu0
        %v383 = vadd.f32 0.0, %v382
        %v384 = vpop.f32.mrf.mxu0
        %v385 = vadd.f32 0.0, %v384
        %386 = vmatprep.mubr.f32.mxu0 0.0
        %387 = vmatmul.mubr.f32.gmra.mxu0 %v233
        %v388 = vpop.f32.mrf.mxu0
        %v389 = vadd.f32 0.0, %v388
        %v390 = vpop.f32.mrf.mxu0
        %v391 = vadd.f32 0.0, %v390
        %392 = vmatprep.mubr.f32.mxu0 0.0
        %393 = vmatmul.mubr.f32.gmra.mxu0 %v236
        %v394 = vpop.f32.mrf.mxu0
        %v395 = vadd.f32 0.0, %v394
        %v396 = vpop.f32.mrf.mxu0
        %v397 = vadd.f32 0.0, %v396
        %398 = vdwg.mxu0
        %v399 = vmul.f32 %v305, 0.5
        %v400 = vmul.f32 %v307, 0.5
        %v401 = vmul.f32 %v311, 0.5
        %v402 = vmul.f32 %v313, 0.5
        %v403 = vmul.f32 %v317, 0.5
        %v404 = vmul.f32 %v319, 0.5
        %v405 = vmul.f32 %v323, 0.5
        %v406 = vmul.f32 %v325, 0.5
        %v407 = vmul.f32 %v329, 0.5
        %v408 = vmul.f32 %v331, 0.5
        %v409 = vmul.f32 %v335, 0.5
        %v410 = vmul.f32 %v337, 0.5
        %v411 = vmul.f32 %v341, 0.5
        %v412 = vmul.f32 %v343, 0.5
        %v413 = vmul.f32 %v347, 0.5
        %v414 = vmul.f32 %v349, 0.5
        %v415 = vmul.f32 %v353, 0.5
        %v416 = vmul.f32 %v355, 0.5
        %v417 = vmul.f32 %v359, 0.5
        %v418 = vmul.f32 %v361, 0.5
        %v419 = vmul.f32 %v365, 0.5
        %v420 = vmul.f32 %v367, 0.5
        %v421 = vmul.f32 %v371, 0.5
        %v422 = vmul.f32 %v373, 0.5
        %v423 = vmul.f32 %v377, 0.5
        %v424 = vmul.f32 %v379, 0.5
        %v425 = vmul.f32 %v383, 0.5
        %v426 = vmul.f32 %v385, 0.5
        %v427 = vmul.f32 %v389, 0.5
        %v428 = vmul.f32 %v391, 0.5
        %v429 = vmul.f32 %v395, 0.5
        %v430 = vmul.f32 %v397, 0.5
        %v431 = vtanh.pop %v399
        %v432 = vtanh.pop %v400
        %v433 = vtanh.pop %v401
        %v434 = vtanh.pop %v402
        %v435 = vtanh.pop %v403
        %v436 = vtanh.pop %v404
        %v437 = vtanh.pop %v405
        %v438 = vtanh.pop %v406
        %v439 = vtanh.pop %v407
        %v440 = vtanh.pop %v408
        %v441 = vtanh.pop %v409
        %v442 = vtanh.pop %v410
        %v443 = vtanh.pop %v411
        %v444 = vtanh.pop %v412
        %v445 = vtanh.pop %v413
        %v446 = vtanh.pop %v414
        %v447 = vtanh.pop %v415
        %v448 = vtanh.pop %v416
        %v449 = vtanh.pop %v417
        %v450 = vtanh.pop %v418
        %v451 = vtanh.pop %v419
        %v452 = vtanh.pop %v420
        %v453 = vtanh.pop %v421
        %v454 = vtanh.pop %v422
        %v455 = vtanh.pop %v423
        %v456 = vtanh.pop %v424
        %v457 = vtanh.pop %v425
        %v458 = vtanh.pop %v426
        %v459 = vtanh.pop %v427
        %v460 = vtanh.pop %v428
        %v461 = vtanh.pop %v429
        %v462 = vtanh.pop %v430
        %v463 = vmul.f32 %v431, 0.5
        %v464 = vmul.f32 %v432, 0.5
        %v465 = vmul.f32 %v433, 0.5
        %v466 = vmul.f32 %v434, 0.5
        %v467 = vmul.f32 %v435, 0.5
        %v468 = vmul.f32 %v436, 0.5
        %v469 = vmul.f32 %v437, 0.5
        %v470 = vmul.f32 %v438, 0.5
        %v471 = vmul.f32 %v439, 0.5
        %v472 = vmul.f32 %v440, 0.5
        %v473 = vmul.f32 %v441, 0.5
        %v474 = vmul.f32 %v442, 0.5
        %v475 = vmul.f32 %v443, 0.5
        %v476 = vmul.f32 %v444, 0.5
        %v477 = vmul.f32 %v445, 0.5
        %v478 = vmul.f32 %v446, 0.5
        %v479 = vmul.f32 %v447, 0.5
        %v480 = vmul.f32 %v448, 0.5
        %v481 = vmul.f32 %v449, 0.5
        %v482 = vmul.f32 %v450, 0.5
        %v483 = vmul.f32 %v451, 0.5
        %v484 = vmul.f32 %v452, 0.5
        %v485 = vmul.f32 %v453, 0.5
        %v486 = vmul.f32 %v454, 0.5
        %v487 = vmul.f32 %v455, 0.5
        %v488 = vmul.f32 %v456, 0.5
        %v489 = vmul.f32 %v457, 0.5
        %v490 = vmul.f32 %v458, 0.5
        %v491 = vmul.f32 %v459, 0.5
        %v492 = vmul.f32 %v460, 0.5
        %v493 = vmul.f32 %v461, 0.5
        %v494 = vmul.f32 %v462, 0.5
        %v495 = vadd.f32 %v463, 0.5
        %v496 = vadd.f32 %v464, 0.5
        %v497 = vadd.f32 %v465, 0.5
        %v498 = vadd.f32 %v466, 0.5
        %v499 = vadd.f32 %v467, 0.5
        %v500 = vadd.f32 %v468, 0.5
        %v501 = vadd.f32 %v469, 0.5
        %v502 = vadd.f32 %v470, 0.5
        %v503 = vadd.f32 %v471, 0.5
        %v504 = vadd.f32 %v472, 0.5
        %v505 = vadd.f32 %v473, 0.5
        %v506 = vadd.f32 %v474, 0.5
        %v507 = vadd.f32 %v475, 0.5
        %v508 = vadd.f32 %v476, 0.5
        %v509 = vadd.f32 %v477, 0.5
        %v510 = vadd.f32 %v478, 0.5
        %v511 = vadd.f32 %v479, 0.5
        %v512 = vadd.f32 %v480, 0.5
        %v513 = vadd.f32 %v481, 0.5
        %v514 = vadd.f32 %v482, 0.5
        %v515 = vadd.f32 %v483, 0.5
        %v516 = vadd.f32 %v484, 0.5
        %v517 = vadd.f32 %v485, 0.5
        %v518 = vadd.f32 %v486, 0.5
        %v519 = vadd.f32 %v487, 0.5
        %v520 = vadd.f32 %v488, 0.5
        %v521 = vadd.f32 %v489, 0.5
        %v522 = vadd.f32 %v490, 0.5
        %v523 = vadd.f32 %v491, 0.5
        %v524 = vadd.f32 %v492, 0.5
        %v525 = vadd.f32 %v493, 0.5
        %v526 = vadd.f32 %v494, 0.5
        %527 = vst [vmem:[%s151] sm:$0xff] %v495
        %528 = vst [vmem:[%s151 + $0x8] sm:$0xff] %v496
        %529 = vst [vmem:[%s151 + $0x10] sm:$0xff] %v497
        %530 = vst [vmem:[%s151 + $0x18] sm:$0xff] %v498
        %531 = vst [vmem:[%s151 + $0x20] sm:$0xff] %v499
        %532 = vst [vmem:[%s151 + $0x28] sm:$0xff] %v500
        %533 = vst [vmem:[%s151 + $0x30] sm:$0xff] %v501
        %534 = vst [vmem:[%s151 + $0x38] sm:$0xff] %v502
        %535 = vst [vmem:[%s151 + $0x40] sm:$0xff] %v503
        %536 = vst [vmem:[%s151 + $0x48] sm:$0xff] %v504
        %537 = vst [vmem:[%s151 + $0x50] sm:$0xff] %v505
        %538 = vst [vmem:[%s151 + $0x58] sm:$0xff] %v506
        %539 = vst [vmem:[%s151 + $0x60] sm:$0xff] %v507
        %540 = vst [vmem:[%s151 + $0x68] sm:$0xff] %v508
        %541 = vst [vmem:[%s151 + $0x70] sm:$0xff] %v509
        %542 = vst [vmem:[%s151 + $0x78] sm:$0xff] %v510
        %543 = vst [vmem:[%s151 + $0x80] sm:$0xff] %v511
        %544 = vst [vmem:[%s151 + $0x88] sm:$0xff] %v512
        %545 = vst [vmem:[%s151 + $0x90] sm:$0xff] %v513
        %546 = vst [vmem:[%s151 + $0x98] sm:$0xff] %v514
        %547 = vst [vmem:[%s151 + $0xa0] sm:$0xff] %v515
        %548 = vst [vmem:[%s151 + $0xa8] sm:$0xff] %v516
        %549 = vst [vmem:[%s151 + $0xb0] sm:$0xff] %v517
        %550 = vst [vmem:[%s151 + $0xb8] sm:$0xff] %v518
        %551 = vst [vmem:[%s151 + $0xc0] sm:$0xff] %v519
        %552 = vst [vmem:[%s151 + $0xc8] sm:$0xff] %v520
        %553 = vst [vmem:[%s151 + $0xd0] sm:$0xff] %v521
        %554 = vst [vmem:[%s151 + $0xd8] sm:$0xff] %v522
        %555 = vst [vmem:[%s151 + $0xe0] sm:$0xff] %v523
        %556 = vst [vmem:[%s151 + $0xe8] sm:$0xff] %v524
        %557 = vst [vmem:[%s151 + $0xf0] sm:$0xff] %v525
        %558 = vst [vmem:[%s151 + $0xf8] sm:$0xff] %v526
        %s559 = sand.u32 %s85, 1
        %s560 = scalar_lea.sflag [#allocation3], %s559
        %s561 = sand.u32 %s85, 1
        %s562 = smul.addr %s561, 256
        %s563 = scalar_lea.vmem [#allocation2], %s562
        // Predicated region
        $region29: #{bilinear_decoder.1} parent=27 // pred_check
          %p564 = pneg %p95
        $region30: #{bilinear_decoder.1} parent=27 // pred_check_branch
          %566 = sbr.rel (%p564) target = $region32
        $region31: #{bilinear_decoder.1} parent=27 // pred_region
          %s567 = smul.u32 16, %s20
          %s568 = smul.u32 2, %s21
          %s570 = ssub.s32 4096, 4096
          %571 = vsyncadd %s560, %s570
          %s572 = smul.addr %s567, 2
          %s573 = sadd.s32 %s568, %s572
          %s574 = smul.addr %s573, 128
          %s575 = scalar_lea.hbm %s2, %s574
          %s576 = sshll.u32 %s563, 4
          %s577 = int_to_ptr.vmem [resolvable:$true] %s576
          %582 = dma.vmem_to_hbm [thread:$0]  %s577, 4096, %s575, %s560, 256, 256, 16
        $region32: #{bilinear_decoder.1} parent=27 // pred_fallthru
          _
      $region28: #{bilinear_decoder.1} parent=5 // pred_fallthru
        _
      %p583 = scmp.le.s32.totalorder 2, %s11
      // Predicated region
      $region33: #{bilinear_decoder.1} parent=5 // pred_check
        %p584 = pneg %p583
      $region34: #{bilinear_decoder.1} parent=5 // pred_check_branch
        %586 = sbr.rel (%p584) target = $region36
      $region35: #{bilinear_decoder.1} parent=5 // pred_region
        %s587 = ssub.s32 %s11, 2
        // Predicated region
        $region37: #{bilinear_decoder.1} parent=35 // pred_check
          %p588 = pneg %p101
        $region38: #{bilinear_decoder.1} parent=35 // pred_check_branch
          %590 = sbr.rel (%p588) target = $region40
        $region39: #{bilinear_decoder.1} parent=35 // pred_region
          %s591 = sand.u32 %s86, 1
          %s592 = scalar_lea.sflag [#allocation3], %s591
          %s593 = sand.u32 %s86, 1
          %s594 = smul.addr %s593, 256
          %s595 = scalar_lea.vmem [#allocation2], %s594
          %596 = dma.done %s592, 4096
        $region40: #{bilinear_decoder.1} parent=35 // pred_fallthru
          _
      $region36: #{bilinear_decoder.1} parent=5 // pred_fallthru
        _
    $region6: #{bilinear_decoder.1} parent=1 // loop_footer
      %s15 = sadd.s32 1, %s11
    $region7: #{bilinear_decoder.1} parent=1 // loop_footer_branch
      %10 = sbr.rel target = $region3
    $region8: #{bilinear_decoder.1} parent=1 // loop_exit
      _
    %597 = vsyncpa [#allocation3], 1
    %s598 = scalar_lea.sflag [#allocation3], 1
    %599 = vsyncpa %s598, 1

</llo_original>
